<compile_context>
chip_gen: v7x
topology: tpu7x:2x2x1
jax: 0.10.0
libtpu: 0.0.40
codegen_flags: <defaults>
</compile_context>

<pallas_src>
import math
from functools import partial

import jax
import jax.numpy as jnp
from jax.experimental import pallas as pl
from jax.experimental.pallas import tpu as pltpu

# Make the pure-JAX reference matmuls run in true f32 so it matches the
# full-precision in-kernel arithmetic.
jax.config.update("jax_default_matmul_precision", "highest")

# Per-batch byte threshold below which the single fully fused kernel is used.
_FUSED_BYTES_MAX = 2 << 20


# ----------------------------- Pallas kernels -----------------------------

def _scse_fused_kernel(x_ref, w1t_ref, w2_ref, wsp_ref, o_ref, *, inv_hw):
    """Whole scSE block for one batch element, x resident in VMEM as (C, HW).

    pool -> C->C/r->C MLP -> sigmoid (channel gate g, shape (C,1))
    MXU 1x1 conv -> sigmoid (spatial gate spa, shape (1,HW))
    out = x * (g + spa)
    """
    x = x_ref[...].astype(jnp.float32)                              # (C, HW)

    # global average pool (lane reduction over HW)
    pooled = jnp.sum(x, axis=-1, keepdims=True) * inv_hw            # (C, 1)

    # channel excitation MLP as broadcast-mul + small reduces (tiny; MXU not
    # worth it for a (C,)->(Cr,)->(C,) matvec)
    h = jnp.maximum(jnp.sum(w1t_ref[...] * pooled, axis=0, keepdims=True), 0.0)  # (1, Cr)
    g = jax.nn.sigmoid(jnp.sum(w2_ref[...] * h, axis=-1, keepdims=True))         # (C, 1)

    # spatial 1x1 conv on the MXU: (8, C) @ (C, HW); only row 0 is real weight
    spa_logit = jnp.dot(wsp_ref[...], x, preferred_element_type=jnp.float32)      # (8, HW)
    spa = jax.nn.sigmoid(spa_logit[0:1, :])                                       # (1, HW)

    o_ref[...] = (x * (g + spa)).astype(o_ref.dtype)


def _pool_kernel(x_ref, o_ref):
    """Per-batch channel sum; output block resident across the HW grid axis."""
    @pl.when(pl.program_id(1) == 0)
    def _():
        o_ref[...] = jnp.zeros_like(o_ref)

    o_ref[...] += jnp.sum(x_ref[...].astype(jnp.float32), axis=-1, keepdims=True)


def _gate_kernel(x_ref, g_ref, wsp_ref, o_ref):
    """Fused epilogue: MXU 1x1 conv + sigmoid + combined gating, one pass over x."""
    x = x_ref[...].astype(jnp.float32)                              # (C, hw_tile)
    spa_logit = jnp.dot(wsp_ref[...], x, preferred_element_type=jnp.float32)       # (8, hw_tile)
    spa = jax.nn.sigmoid(spa_logit[0:1, :])                                        # (1, hw_tile)
    o_ref[...] = (x * (g_ref[...] + spa)).astype(o_ref.dtype)


# ----------------------------- forward -----------------------------

@jax.jit
def scse_forward(params, x_nchw):
    N, C, H, W = x_nchw.shape
    HW = H * W
    cr = params['w_ce2'].shape[1]
    x = x_nchw.reshape(N, C, HW)          # free: merges contiguous trailing dims

    if C * HW * 4 <= _FUSED_BYTES_MAX:
        # ---------------- single fully fused kernel, grid=(N,) ----------------
        out = pl.pallas_call(
            partial(_scse_fused_kernel, inv_hw=1.0 / HW),
            out_shape=jax.ShapeDtypeStruct((N, C, HW), x.dtype),
            grid=(N,),
            in_specs=[
                pl.BlockSpec((None, C, HW), lambda n: (n, 0, 0)),
                pl.BlockSpec((C, cr), lambda n: (0, 0)),
                pl.BlockSpec((C, cr), lambda n: (0, 0)),
                pl.BlockSpec((8, C), lambda n: (0, 0)),
            ],
            out_specs=pl.BlockSpec((None, C, HW), lambda n: (n, 0, 0)),
            compiler_params=pltpu.CompilerParams(
                dimension_semantics=("parallel",)),
            cost_estimate=pl.CostEstimate(
                flops=6 * N * C * HW,
                transcendentals=N * (HW + C),
                bytes_accessed=4 * (2 * N * C * HW + 3 * 8 * C)),
        )(x, params['w_ce1_t'], params['w_ce2'], params['w_sp8'])
        return out.reshape(N, C, H, W)

    # ---------------- tiled two-pass path for large feature maps ----------------
    # lane-aligned HW tiles, ~1-2 MiB per block, padding kept under one tile
    hw_cap = max(128, min(8192, ((2 << 20) // (C * 4)) // 128 * 128))
    n_t = pl.cdiv(HW, hw_cap)
    hw_tile = ((pl.cdiv(HW, n_t) + 127) // 128) * 128
    HWp = hw_tile * n_t
    if HWp != HW:
        x = jnp.pad(x, ((0, 0), (0, 0), (0, HWp - HW)))

    grid = (N, n_t)

    # --- global average pool (accumulator kernel) ---
    pooled_sum = pl.pallas_call(
        _pool_kernel,
        out_shape=jax.ShapeDtypeStruct((N, C, 1), jnp.float32),
        grid=grid,
        in_specs=[pl.BlockSpec((None, C, hw_tile), lambda n, t: (n, 0, t))],
        out_specs=pl.BlockSpec((None, C, 1), lambda n, t: (n, 0, 0)),
        compiler_params=pltpu.CompilerParams(
            dimension_semantics=("parallel", "arbitrary")),
        cost_estimate=pl.CostEstimate(
            flops=N * C * HWp, transcendentals=0,
            bytes_accessed=4 * (N * C * HWp + N * C)),
    )(x)

    # --- channel excitation MLP: tiny (N, C) matmuls, plain jnp ---
    pooled = pooled_sum[:, :, 0] * (1.0 / HW)                       # (N, C)
    h = jnp.maximum(pooled @ params['w_ce1'].T, 0.0)
    g = jax.nn.sigmoid(h @ params['w_ce2'].T)                       # (N, C)
    g = g[:, :, None].astype(jnp.float32)                           # (N, C, 1)

    # --- fused spatial conv + sigmoid + combined gating (single pass over x) ---
    out = pl.pallas_call(
        _gate_kernel,
        out_shape=jax.ShapeDtypeStruct((N, C, HWp), x.dtype),
        grid=grid,
        in_specs=[
            pl.BlockSpec((None, C, hw_tile), lambda n, t: (n, 0, t)),
            pl.BlockSpec((None, C, 1), lambda n, t: (n, 0, 0)),
            pl.BlockSpec((8, C), lambda n, t: (0, 0)),
        ],
        out_specs=pl.BlockSpec((None, C, hw_tile), lambda n, t: (n, 0, t)),
        compiler_params=pltpu.CompilerParams(
            dimension_semantics=("parallel", "parallel")),
        cost_estimate=pl.CostEstimate(
            flops=N * HWp * (2 * C + 2 * C),
            transcendentals=N * HWp,
            bytes_accessed=4 * (2 * N * C * HWp + N * C + 8 * C)),
    )(x, g, params['w_sp8'])

    if HWp != HW:
        out = out[:, :, :HW]
    return out.reshape(N, C, H, W)


# ----------------------------- parameters -----------------------------

def make_params(key, channel, reduction=16):
    cr = max(1, channel // reduction)
    k1, k2, k3 = jax.random.split(key, 3)

    def uniform(k, shape, fan_in):
        bound = 1.0 / math.sqrt(fan_in)            # PyTorch Conv2d default-ish init
        return jax.random.uniform(k, shape, jnp.float32, -bound, bound)

    w_ce1 = uniform(k1, (cr, channel), channel)    # Conv2d(C, C//r, 1, bias=False)
    w_ce2 = uniform(k2, (channel, cr), cr)         # Conv2d(C//r, C, 1, bias=False)
    w_sp = uniform(k3, (channel,), channel)        # Conv2d(C, 1, 1, bias=False)

    # kernel-friendly forms, built ONCE (no per-call pads/scatters):
    w_ce1_t = jnp.asarray(w_ce1.T)                                  # (C, Cr)
    w_sp8 = jnp.zeros((8, channel), jnp.float32).at[0].set(w_sp)    # (8, C), row0 real
    return {'w_ce1': w_ce1, 'w_ce2': w_ce2, 'w_sp': w_sp,
            'w_ce1_t': w_ce1_t, 'w_sp8': w_sp8}


# ----------------------------- pure-JAX reference -----------------------------

def scse_reference(params, x_nchw):
    pooled = jnp.mean(x_nchw, axis=(2, 3))                          # (N, C)
    h = jnp.maximum(pooled @ params['w_ce1'].T, 0.0)
    g = jax.nn.sigmoid(h @ params['w_ce2'].T)                       # (N, C)
    chn_se = x_nchw * g[:, :, None, None]
    spa = jax.nn.sigmoid(jnp.einsum('nchw,c->nhw', x_nchw, params['w_sp']))
    spa_se = x_nchw * spa[:, None, :, :]
    return chn_se + spa_se                                          # torch.add(chn_se, 1, spa_se)


if __name__ == "__main__":
    key = jax.random.PRNGKey(0)
    kx, kp = jax.random.split(key)

    # SCSEBlock(channel=64, reduction=16) as used in CDNet34's decoder.
    N, C, H, W = 2, 64, 16, 16
    params = make_params(kp, C, reduction=16)
    x = jax.random.normal(kx, (N, C, H, W), jnp.float32)

    out = jax.block_until_ready(scse_forward(params, x))            # fused path
    assert out.shape == (N, C, H, W), out.shape
    assert bool(jnp.all(jnp.isfinite(out)))
    ref = scse_reference(params, x)
    assert bool(jnp.allclose(out, ref, rtol=1e-4, atol=1e-4)), \
        float(jnp.max(jnp.abs(out - ref)))

    # also exercise the tiled two-pass path on a larger feature map
    x2 = jax.random.normal(kx, (1, C, 96, 96), jnp.float32)
    out2 = jax.block_until_ready(scse_forward(params, x2))          # tiled path
    ref2 = scse_reference(params, x2)
    assert bool(jnp.allclose(out2, ref2, rtol=1e-4, atol=1e-4)), \
        float(jnp.max(jnp.abs(out2 - ref2)))

    print("KERNEL_OK")
</pallas_src>

<mosaic_0001>
module attributes {stable_mosaic.version = 11 : i64} {
  func.func @_scse_fused_kernel(%arg0: i32, %arg1: memref<1x64x256xf32, #tpu.memory_space<vmem>>, %arg2: memref<64x4xf32, #tpu.memory_space<vmem>>, %arg3: memref<64x4xf32, #tpu.memory_space<vmem>>, %arg4: memref<8x64xf32, #tpu.memory_space<vmem>>, %arg5: memref<1x64x256xf32, #tpu.memory_space<vmem>>) attributes {dimension_semantics = [#tpu.dimension_semantics<parallel>], iteration_bounds = array<i64: 2>, scalar_prefetch = 0 : i64, scratch_operands = 0 : i64, tpu.core_type = #tpu.core_type<tc>, window_params = [{transform_indices = @transform_0, window_bounds = array<i64: 1, 64, 256>}, {pipeline_mode = #tpu.pipeline_mode<synchronous>, transform_indices = @transform_1, window_bounds = array<i64: 64, 4>}, {pipeline_mode = #tpu.pipeline_mode<synchronous>, transform_indices = @transform_2, window_bounds = array<i64: 64, 4>}, {pipeline_mode = #tpu.pipeline_mode<synchronous>, transform_indices = @transform_3, window_bounds = array<i64: 8, 64>}, {transform_indices = @transform_4, window_bounds = array<i64: 1, 64, 256>}]} {
    %c0 = arith.constant 0 : index
    %c0_0 = arith.constant 0 : index
    %c0_1 = arith.constant 0 : index
    %0 = vector.load %arg1[%c0, %c0_0, %c0_1] : memref<1x64x256xf32, #tpu.memory_space<vmem>>, vector<1x64x256xf32>
    %1 = vector.shape_cast %0 : vector<1x64x256xf32> to vector<64x256xf32>
    %cst = arith.constant dense<0.000000e+00> : vector<64xf32>
    %2 = vector.multi_reduction <add>, %1, %cst [1] : vector<64x256xf32> to vector<64xf32>
    %3 = vector.shape_cast %2 : vector<64xf32> to vector<64x1xf32>
    %cst_2 = arith.constant 3.906250e-03 : f32
    %4 = vector.broadcast %cst_2 : f32 to vector<64x1xf32>
    %5 = arith.mulf %3, %4 : vector<64x1xf32>
    %c0_3 = arith.constant 0 : index
    %c0_4 = arith.constant 0 : index
    %6 = vector.load %arg2[%c0_3, %c0_4] : memref<64x4xf32, #tpu.memory_space<vmem>>, vector<64x4xf32>
    %7 = vector.broadcast %5 : vector<64x1xf32> to vector<64x4xf32>
    %8 = arith.mulf %6, %7 : vector<64x4xf32>
    %cst_5 = arith.constant dense<0.000000e+00> : vector<4xf32>
    %9 = vector.multi_reduction <add>, %8, %cst_5 [0] : vector<64x4xf32> to vector<4xf32>
    %10 = vector.shape_cast %9 : vector<4xf32> to vector<1x4xf32>
    %cst_6 = arith.constant 0.000000e+00 : f32
    %11 = vector.broadcast %cst_6 : f32 to vector<1x4xf32>
    %12 = arith.maximumf %10, %11 : vector<1x4xf32>
    %c0_7 = arith.constant 0 : index
    %c0_8 = arith.constant 0 : index
    %13 = vector.load %arg3[%c0_7, %c0_8] : memref<64x4xf32, #tpu.memory_space<vmem>>, vector<64x4xf32>
    %14 = vector.broadcast %12 : vector<1x4xf32> to vector<64x4xf32>
    %15 = arith.mulf %13, %14 : vector<64x4xf32>
    %cst_9 = arith.constant dense<0.000000e+00> : vector<64xf32>
    %16 = vector.multi_reduction <add>, %15, %cst_9 [1] : vector<64x4xf32> to vector<64xf32>
    %17 = vector.shape_cast %16 : vector<64xf32> to vector<64x1xf32>
    %18 = arith.negf %17 : vector<64x1xf32>
    %19 = math.exp %18 : vector<64x1xf32>
    %cst_10 = arith.constant 1.000000e+00 : f32
    %20 = vector.broadcast %cst_10 : f32 to vector<64x1xf32>
    %21 = arith.addf %20, %19 : vector<64x1xf32>
    %22 = arith.divf %20, %21 : vector<64x1xf32>
    %c0_11 = arith.constant 0 : index
    %c0_12 = arith.constant 0 : index
    %23 = vector.load %arg4[%c0_11, %c0_12] : memref<8x64xf32, #tpu.memory_space<vmem>>, vector<8x64xf32>
    %cst_13 = arith.constant dense<0.000000e+00> : vector<8x256xf32>
    %24 = tpu.matmul %23, %1, %cst_13 {dimension_numbers = #tpu.dot_dimension_numbers<[1], [0], [0], [1], [0, 0, 1, 1], [], []>, precision = #tpu.contract_precision<fp32>} : vector<8x64xf32>, vector<64x256xf32>, vector<8x256xf32> -> vector<8x256xf32>
    %25 = vector.extract_strided_slice %24 {offsets = [0, 0], sizes = [1, 256], strides = [1, 1]} : vector<8x256xf32> to vector<1x256xf32>
    %26 = arith.negf %25 : vector<1x256xf32>
    %27 = math.exp %26 : vector<1x256xf32>
    %cst_14 = arith.constant 1.000000e+00 : f32
    %28 = vector.broadcast %cst_14 : f32 to vector<1x256xf32>
    %29 = arith.addf %28, %27 : vector<1x256xf32>
    %30 = arith.divf %28, %29 : vector<1x256xf32>
    %31 = vector.broadcast %22 : vector<64x1xf32> to vector<64x256xf32>
    %32 = vector.broadcast %30 : vector<1x256xf32> to vector<64x256xf32>
    %33 = arith.addf %31, %32 : vector<64x256xf32>
    %34 = arith.mulf %1, %33 : vector<64x256xf32>
    %c0_15 = arith.constant 0 : index
    %c0_16 = arith.constant 0 : index
    %c0_17 = arith.constant 0 : index
    %35 = vector.load %arg5[%c0_15, %c0_16, %c0_17] : memref<1x64x256xf32, #tpu.memory_space<vmem>>, vector<1x64x256xf32>
    %36 = vector.shape_cast %35 : vector<1x64x256xf32> to vector<64x256xf32>
    %37 = vector.shape_cast %34 : vector<64x256xf32> to vector<1x64x256xf32>
    tpu.vector_store %arg5[%c0_15, %c0_16, %c0_17], %37 {strides = array<i32>} : memref<1x64x256xf32, #tpu.memory_space<vmem>>, vector<1x64x256xf32>,
    return
  }
  func.func @transform_0(%arg0: i32) -> (i32, i32, i32) {
    %c0_i32 = arith.constant 0 : i32
    %c0_i32_0 = arith.constant 0 : i32
    %c0_i32_1 = arith.constant 0 : i32
    return %arg0, %c0_i32, %c0_i32_0 : i32, i32, i32
  }
  func.func @transform_1(%arg0: i32) -> (i32, i32) {
    %c0_i32 = arith.constant 0 : i32
    %c0_i32_0 = arith.constant 0 : i32
    %c0_i32_1 = arith.constant 0 : i32
    return %c0_i32, %c0_i32_0 : i32, i32
  }
  func.func @transform_2(%arg0: i32) -> (i32, i32) {
    %c0_i32 = arith.constant 0 : i32
    %c0_i32_0 = arith.constant 0 : i32
    %c0_i32_1 = arith.constant 0 : i32
    return %c0_i32, %c0_i32_0 : i32, i32
  }
  func.func @transform_3(%arg0: i32) -> (i32, i32) {
    %c0_i32 = arith.constant 0 : i32
    %c0_i32_0 = arith.constant 0 : i32
    %c0_i32_1 = arith.constant 0 : i32
    return %c0_i32, %c0_i32_0 : i32, i32
  }
  func.func @transform_4(%arg0: i32) -> (i32, i32, i32) {
    %c0_i32 = arith.constant 0 : i32
    %c0_i32_0 = arith.constant 0 : i32
    %c0_i32_1 = arith.constant 0 : i32
    return %arg0, %c0_i32, %c0_i32_0 : i32, i32, i32
  }
}

</mosaic_0001>

<llo_original>
// kernel: scse_forward.1
$region0: #{scse_forward.1}
  #allocation0 [shape = 'u32[]', space=smem, size = 0x4, offset = 0x4, fixed_abs, tag = 'smem constant byte address 0x4 - core index']
  #allocation1 [shape = 'u32[144,128]{1,0:T(1,128)}', space=vmem, size = 0x12000, scoped, tag = 'internal scratch']
  %s0 = inlined_call_operand.vmem [shape: f32[2,64,256], index: 0, kind: input, shape index: {}]
  %s1 = inlined_call_operand.vmem [shape: f32[64,4], index: 1, kind: input, shape index: {}]
  %s2 = inlined_call_operand.vmem [shape: f32[64,4], index: 2, kind: input, shape index: {}]
  %s3 = inlined_call_operand.vmem [shape: f32[8,64], index: 3, kind: input, shape index: {}]
  %s4 = inlined_call_operand.vmem [shape: f32[2,64,256], index: 4, kind: output, shape index: {}]
  %s5 = sld [smem:[#allocation0]]
  $region49: #{scse_forward.1} parent=0
    _
  %s7 = ssub.s32 1, %s5
  %s8 = scalar_select 0, %s7, %s5
  loop: start=0, step=1, limit=4
  $region2: #{scse_forward.1} parent=0 // loop_pre_header
    _
  $region3: #{scse_forward.1} parent=0 // loop_header
    %s10 = sphi 0, %s14
    %p11 = scmp.ge.s32.totalorder %s10, 4
    %s20 = sphi 0, %s22
    %s23 = sphi 0, %s20
    %s24 = sphi 0, %s23
    %s40 = sphi 0, %s24
    %s44 = sphi 0, %s44
    %s46 = sphi 0, %s44
    %s47 = sphi 0, %s46
    %s61 = sphi 0, %s47
    %s65 = sphi 0, %s65
    %s67 = sphi 0, %s65
    %s68 = sphi 0, %s67
    %s82 = sphi 0, %s68
    %s86 = sphi 0, %s86
    %s88 = sphi 0, %s86
    %s89 = sphi 0, %s88
    %s103 = sphi 0, %s89
    %s109 = sphi 0, %s111
    %s112 = sphi 0, %s109
    %s113 = sphi 0, %s112
    %s129 = sphi 0, %s113
  $region4: #{scse_forward.1} parent=0 // loop_header_branch
    %13 = sbr.rel (%p11) target = $region8
  $region5: #{scse_forward.1} parent=0 // loop_body
    %s15 = ssub.s32 %s10, 1
    %s16 = ssub.s32 %s10, 2
    %s17 = sadd.s32 %s10, 1
    %s18 = ssub.s32 %s10, %s17
    %p19 = scmp.eq.s32.totalorder %s18, 0
    %s21 = sadd.s32 %s20, 1
    %s22 = scalar_select %p19, %s20, %s21
    %p25 = pneg %p19
    %p26 = scmp.eq.s32.totalorder %s10, 1
    %p27 = por %p25, %p26
    %p28 = scmp.ne.s32.totalorder %s20, %s23
    %p29 = scmp.eq.s32.totalorder %s10, 0
    %p30 = por %p28, %p29
    %p31 = scmp.ne.s32.totalorder %s20, %s23
    %p32 = scmp.eq.s32.totalorder %s15, 1
    %p33 = por %p31, %p32
    %p34 = scmp.ne.s32.totalorder %s23, %s24
    %p35 = scmp.eq.s32.totalorder %s15, 0
    %p36 = por %p34, %p35
    %p37 = scmp.ne.s32.totalorder %s23, %s24
    %p38 = scmp.eq.s32.totalorder %s16, 1
    %p39 = por %p37, %p38
    %p41 = scmp.ne.s32.totalorder %s24, %s40
    %p42 = scmp.eq.s32.totalorder %s16, 0
    %p43 = por %p41, %p42
    %s45 = sadd.s32 %s44, 1
    %p48 = scmp.eq.s32.totalorder %s10, 1
    %p49 = scmp.ne.s32.totalorder %s44, %s46
    %p50 = scmp.eq.s32.totalorder %s10, 0
    %p51 = por %p49, %p50
    %p52 = scmp.ne.s32.totalorder %s44, %s46
    %p53 = scmp.eq.s32.totalorder %s15, 1
    %p54 = por %p52, %p53
    %p55 = scmp.ne.s32.totalorder %s46, %s47
    %p56 = scmp.eq.s32.totalorder %s15, 0
    %p57 = por %p55, %p56
    %p58 = scmp.ne.s32.totalorder %s46, %s47
    %p59 = scmp.eq.s32.totalorder %s16, 1
    %p60 = por %p58, %p59
    %p62 = scmp.ne.s32.totalorder %s47, %s61
    %p63 = scmp.eq.s32.totalorder %s16, 0
    %p64 = por %p62, %p63
    %s66 = sadd.s32 %s65, 1
    %p69 = scmp.eq.s32.totalorder %s10, 1
    %p70 = scmp.ne.s32.totalorder %s65, %s67
    %p71 = scmp.eq.s32.totalorder %s10, 0
    %p72 = por %p70, %p71
    %p73 = scmp.ne.s32.totalorder %s65, %s67
    %p74 = scmp.eq.s32.totalorder %s15, 1
    %p75 = por %p73, %p74
    %p76 = scmp.ne.s32.totalorder %s67, %s68
    %p77 = scmp.eq.s32.totalorder %s15, 0
    %p78 = por %p76, %p77
    %p79 = scmp.ne.s32.totalorder %s67, %s68
    %p80 = scmp.eq.s32.totalorder %s16, 1
    %p81 = por %p79, %p80
    %p83 = scmp.ne.s32.totalorder %s68, %s82
    %p84 = scmp.eq.s32.totalorder %s16, 0
    %p85 = por %p83, %p84
    %s87 = sadd.s32 %s86, 1
    %p90 = scmp.eq.s32.totalorder %s10, 1
    %p91 = scmp.ne.s32.totalorder %s86, %s88
    %p92 = scmp.eq.s32.totalorder %s10, 0
    %p93 = por %p91, %p92
    %p94 = scmp.ne.s32.totalorder %s86, %s88
    %p95 = scmp.eq.s32.totalorder %s15, 1
    %p96 = por %p94, %p95
    %p97 = scmp.ne.s32.totalorder %s88, %s89
    %p98 = scmp.eq.s32.totalorder %s15, 0
    %p99 = por %p97, %p98
    %p100 = scmp.ne.s32.totalorder %s88, %s89
    %p101 = scmp.eq.s32.totalorder %s16, 1
    %p102 = por %p100, %p101
    %p104 = scmp.ne.s32.totalorder %s89, %s103
    %p105 = scmp.eq.s32.totalorder %s16, 0
    %p106 = por %p104, %p105
    %s107 = ssub.s32 %s10, %s17
    %p108 = scmp.eq.s32.totalorder %s107, 0
    %s110 = sadd.s32 %s109, 1
    %s111 = scalar_select %p108, %s109, %s110
    %p114 = pneg %p108
    %p115 = scmp.eq.s32.totalorder %s10, 1
    %p116 = por %p114, %p115
    %p117 = scmp.ne.s32.totalorder %s109, %s112
    %p118 = scmp.eq.s32.totalorder %s10, 0
    %p119 = por %p117, %p118
    %p120 = scmp.ne.s32.totalorder %s109, %s112
    %p121 = scmp.eq.s32.totalorder %s15, 1
    %p122 = por %p120, %p121
    %p123 = scmp.ne.s32.totalorder %s112, %s113
    %p124 = scmp.eq.s32.totalorder %s15, 0
    %p125 = por %p123, %p124
    %p126 = scmp.ne.s32.totalorder %s112, %s113
    %p127 = scmp.eq.s32.totalorder %s16, 1
    %p128 = por %p126, %p127
    %p130 = scmp.ne.s32.totalorder %s113, %s129
    %p131 = scmp.eq.s32.totalorder %s16, 0
    %p132 = por %p130, %p131
    %p133 = scmp.le.s32.totalorder 1, %s10
    %p134 = scmp.lt.s32.totalorder %s10, 3
    %p135 = pnand %p133, %p134
    %p136 = pneg %p135
    // Predicated region
    $region9: #{scse_forward.1} parent=5 // pred_check
      _
    $region10: #{scse_forward.1} parent=5 // pred_check_branch
      %138 = sbr.rel (%p135) target = $region12
    $region11: #{scse_forward.1} parent=5 // pred_region
      %s139 = ssub.s32 %s10, 1
      // Predicated region
      $region13: #{scse_forward.1} parent=11 // pred_check
        %p140 = pneg %p57
      $region14: #{scse_forward.1} parent=11 // pred_check_branch
        %142 = sbr.rel (%p140) target = $region16
      $region15: #{scse_forward.1} parent=11 // pred_region
        _
      $region16: #{scse_forward.1} parent=11 // pred_fallthru
        _
      // Predicated region
      $region17: #{scse_forward.1} parent=11 // pred_check
        %p143 = pneg %p78
      $region18: #{scse_forward.1} parent=11 // pred_check_branch
        %145 = sbr.rel (%p143) target = $region20
      $region19: #{scse_forward.1} parent=11 // pred_region
        _
      $region20: #{scse_forward.1} parent=11 // pred_fallthru
        _
      // Predicated region
      $region21: #{scse_forward.1} parent=11 // pred_check
        %p146 = pneg %p99
      $region22: #{scse_forward.1} parent=11 // pred_check_branch
        %148 = sbr.rel (%p146) target = $region24
      $region23: #{scse_forward.1} parent=11 // pred_region
        _
      $region24: #{scse_forward.1} parent=11 // pred_fallthru
        _
    $region12: #{scse_forward.1} parent=5 // pred_fallthru
      _
    %p149 = scmp.lt.s32.totalorder %s10, 2
    // Predicated region
    $region25: #{scse_forward.1} parent=5 // pred_check
      %p150 = pneg %p149
    $region26: #{scse_forward.1} parent=5 // pred_check_branch
      %152 = sbr.rel (%p150) target = $region28
    $region27: #{scse_forward.1} parent=5 // pred_region
      // Predicated region
      $region29: #{scse_forward.1} parent=27 // pred_check
        %p153 = pneg %p30
      $region30: #{scse_forward.1} parent=27 // pred_check_branch
        %155 = sbr.rel (%p153) target = $region32
      $region31: #{scse_forward.1} parent=27 // pred_region
        %p156 = scmp.lt.s32.totalorder %s10, 1
        %s157 = scalar_select %p156, %s10, 1
        %s158 = smul.addr %s157, 16
        %s159 = smul.addr %s158, 8
        %s160 = scalar_lea.vmem %s0, %s159
      $region32: #{scse_forward.1} parent=27 // pred_fallthru
        _
    $region28: #{scse_forward.1} parent=5 // pred_fallthru
      _
    %p161 = scmp.le.s32.totalorder 1, %s10
    %p162 = scmp.lt.s32.totalorder %s10, 3
    %p163 = pnand %p161, %p162
    %p164 = pneg %p163
    // Predicated region
    $region33: #{scse_forward.1} parent=5 // pred_check
      _
    $region34: #{scse_forward.1} parent=5 // pred_check_branch
      %166 = sbr.rel (%p163) target = $region36
    $region35: #{scse_forward.1} parent=5 // pred_region
      %s167 = ssub.s32 %s10, 1
      %p168 = scmp.lt.s32.totalorder %s15, 1
      %s169 = scalar_select %p168, %s15, 1
      %s170 = smul.addr %s169, 16
      %s171 = smul.addr %s170, 8
      %s172 = scalar_lea.vmem %s0, %s171
      %p173 = pneg %p36
      %p174 = pneg %p33
      %p175 = pneg %p57
      %p176 = pneg %p54
      %p177 = pneg %p78
      %p178 = pneg %p75
      %p179 = pneg %p99
      %p180 = pneg %p96
      %p181 = pneg %p125
      %p182 = pneg %p122
      %p183 = scmp.lt.s32.totalorder %s15, 1
      %s184 = scalar_select %p183, %s15, 1
      %s185 = smul.addr %s184, 16
      %s186 = smul.addr %s185, 8
      %s187 = scalar_lea.vmem %s4, %s186
      %p188 = scmp.lt.s32.totalorder %s15, 1
      %s189 = scalar_select %p188, %s15, 1
      %s190 = smul.addr %s189, 16
      %s191 = smul.addr %s190, 8
      %s192 = scalar_lea.vmem %s0, %s191
      %p193 = scmp.lt.s32.totalorder %s15, 1
      %s194 = scalar_select %p193, %s15, 1
      %s195 = smul.addr %s194, 16
      %s196 = smul.addr %s195, 8
      %s197 = scalar_lea.vmem %s4, %s196
      %v198 = vld [vmem:[%s192] sm:$0xff]
      %v199 = vld [vmem:[%s192 + $0x8] sm:$0xff]
      %v200 = vld [vmem:[%s192 + $0x10] sm:$0xff]
      %v201 = vld [vmem:[%s192 + $0x18] sm:$0xff]
      %v202 = vld [vmem:[%s192 + $0x20] sm:$0xff]
      %v203 = vld [vmem:[%s192 + $0x28] sm:$0xff]
      %v204 = vld [vmem:[%s192 + $0x30] sm:$0xff]
      %v205 = vld [vmem:[%s192 + $0x38] sm:$0xff]
      %v206 = vld [vmem:[%s192 + $0x40] sm:$0xff]
      %v207 = vld [vmem:[%s192 + $0x48] sm:$0xff]
      %v208 = vld [vmem:[%s192 + $0x50] sm:$0xff]
      %v209 = vld [vmem:[%s192 + $0x58] sm:$0xff]
      %v210 = vld [vmem:[%s192 + $0x60] sm:$0xff]
      %v211 = vld [vmem:[%s192 + $0x68] sm:$0xff]
      %v212 = vld [vmem:[%s192 + $0x70] sm:$0xff]
      %v213 = vld [vmem:[%s192 + $0x78] sm:$0xff]
      %v214 = vadd.f32 %v198, %v199
      %215 = vadd.xlane.f32.xlu0 %v214
      %v216 = vpop.xlane.xlu0 %215
      %v217 = vadd.f32 %v200, %v201
      %218 = vadd.xlane.f32.xlu0 %v217
      %v219 = vpop.xlane.xlu0 %218
      %v220 = vadd.f32 %v202, %v203
      %221 = vadd.xlane.f32.xlu0 %v220
      %v222 = vpop.xlane.xlu0 %221
      %v223 = vadd.f32 %v204, %v205
      %224 = vadd.xlane.f32.xlu0 %v223
      %v225 = vpop.xlane.xlu0 %224
      %v226 = vadd.f32 %v206, %v207
      %227 = vadd.xlane.f32.xlu0 %v226
      %v228 = vpop.xlane.xlu0 %227
      %v229 = vadd.f32 %v208, %v209
      %230 = vadd.xlane.f32.xlu0 %v229
      %v231 = vpop.xlane.xlu0 %230
      %v232 = vadd.f32 %v210, %v211
      %233 = vadd.xlane.f32.xlu0 %v232
      %v234 = vpop.xlane.xlu0 %233
      %v235 = vadd.f32 %v212, %v213
      %236 = vadd.xlane.f32.xlu0 %v235
      %v237 = vpop.xlane.xlu0 %236
      %v238 = vmul.f32 %v216, 0.00390625
      %v239 = vmul.f32 %v219, 0.00390625
      %v240 = vmul.f32 %v222, 0.00390625
      %v241 = vmul.f32 %v225, 0.00390625
      %v242 = vmul.f32 %v228, 0.00390625
      %v243 = vmul.f32 %v231, 0.00390625
      %v244 = vmul.f32 %v234, 0.00390625
      %v245 = vmul.f32 %v237, 0.00390625
      %v246 = vld [vmem:[%s1] sm:$0xff]
      %v247 = vld [vmem:[%s1 + $0x8] sm:$0xff]
      %v248 = vld [vmem:[%s1 + $0x10] sm:$0xff]
      %v249 = vld [vmem:[%s1 + $0x18] sm:$0xff]
      %v250 = vld [vmem:[%s1 + $0x20] sm:$0xff]
      %v251 = vld [vmem:[%s1 + $0x28] sm:$0xff]
      %v252 = vld [vmem:[%s1 + $0x30] sm:$0xff]
      %v253 = vld [vmem:[%s1 + $0x38] sm:$0xff]
      %v254 = vmul.f32 %v246, %v238
      %v255 = vmul.f32 %v247, %v239
      %v256 = vmul.f32 %v248, %v240
      %v257 = vmul.f32 %v249, %v241
      %v258 = vmul.f32 %v250, %v242
      %v259 = vmul.f32 %v251, %v243
      %v260 = vmul.f32 %v252, %v244
      %v261 = vmul.f32 %v253, %v245
      %vm262 = vcmask 31744
      %v263 = vsel %vm262, %v254, 0.0
      %v264 = vsel %vm262, %v255, 0.0
      %v265 = vadd.f32 %v263, %v264
      %v266 = vsel %vm262, %v256, 0.0
      %v267 = vadd.f32 %v265, %v266
      %v268 = vsel %vm262, %v257, 0.0
      %v269 = vadd.f32 %v267, %v268
      %v270 = vsel %vm262, %v258, 0.0
      %v271 = vadd.f32 %v269, %v270
      %v272 = vsel %vm262, %v259, 0.0
      %v273 = vadd.f32 %v271, %v272
      %v274 = vsel %vm262, %v260, 0.0
      %v275 = vadd.f32 %v273, %v274
      %v276 = vsel %vm262, %v261, 0.0
      %v277 = vadd.f32 %v275, %v276
      %v278 = vrot.slane %v277, 4
      %v279 = vadd.f32 %v277, %v278
      %v280 = vrot.slane %v279, 2
      %v281 = vadd.f32 %v279, %v280
      %v282 = vrot.slane %v281, 1
      %v283 = vadd.f32 %v281, %v282
      %v284 = vmax.f32 %v283, 0.0
      %v285 = vld [vmem:[%s2] sm:$0xff]
      %v286 = vld [vmem:[%s2 + $0x8] sm:$0xff]
      %v287 = vld [vmem:[%s2 + $0x10] sm:$0xff]
      %v288 = vld [vmem:[%s2 + $0x18] sm:$0xff]
      %v289 = vld [vmem:[%s2 + $0x20] sm:$0xff]
      %v290 = vld [vmem:[%s2 + $0x28] sm:$0xff]
      %v291 = vld [vmem:[%s2 + $0x30] sm:$0xff]
      %v292 = vld [vmem:[%s2 + $0x38] sm:$0xff]
      %v293 = vmul.f32 %v285, %v284
      %v294 = vmul.f32 %v286, %v284
      %v295 = vmul.f32 %v287, %v284
      %v296 = vmul.f32 %v288, %v284
      %v297 = vmul.f32 %v289, %v284
      %v298 = vmul.f32 %v290, %v284
      %v299 = vmul.f32 %v291, %v284
      %v300 = vmul.f32 %v292, %v284
      %v301 = vsel %vm262, %v293, 0.0
      %302 = vadd.xlane.f32.xlu0 %v301
      %v303 = vpop.xlane.xlu0 %302
      %v304 = vsel %vm262, %v294, 0.0
      %305 = vadd.xlane.f32.xlu0 %v304
      %v306 = vpop.xlane.xlu0 %305
      %v307 = vsel %vm262, %v295, 0.0
      %308 = vadd.xlane.f32.xlu0 %v307
      %v309 = vpop.xlane.xlu0 %308
      %v310 = vsel %vm262, %v296, 0.0
      %311 = vadd.xlane.f32.xlu0 %v310
      %v312 = vpop.xlane.xlu0 %311
      %v313 = vsel %vm262, %v297, 0.0
      %314 = vadd.xlane.f32.xlu0 %v313
      %v315 = vpop.xlane.xlu0 %314
      %v316 = vsel %vm262, %v298, 0.0
      %317 = vadd.xlane.f32.xlu0 %v316
      %v318 = vpop.xlane.xlu0 %317
      %v319 = vsel %vm262, %v299, 0.0
      %320 = vadd.xlane.f32.xlu0 %v319
      %v321 = vpop.xlane.xlu0 %320
      %v322 = vsel %vm262, %v300, 0.0
      %323 = vadd.xlane.f32.xlu0 %v322
      %v324 = vpop.xlane.xlu0 %323
      %v325 = vxor.u32 %v303, 2147483648
      %v326 = vxor.u32 %v306, 2147483648
      %v327 = vxor.u32 %v309, 2147483648
      %v328 = vxor.u32 %v312, 2147483648
      %v329 = vxor.u32 %v315, 2147483648
      %v330 = vxor.u32 %v318, 2147483648
      %v331 = vxor.u32 %v321, 2147483648
      %v332 = vxor.u32 %v324, 2147483648
      %v333 = vmul.f32 %v325, 1.442695
      %v334 = vpow.pop %v333
      %v335 = vmul.f32 %v326, 1.442695
      %v336 = vpow.pop %v335
      %v337 = vmul.f32 %v327, 1.442695
      %v338 = vpow.pop %v337
      %v339 = vmul.f32 %v328, 1.442695
      %v340 = vpow.pop %v339
      %v341 = vmul.f32 %v329, 1.442695
      %v342 = vpow.pop %v341
      %v343 = vmul.f32 %v330, 1.442695
      %v344 = vpow.pop %v343
      %v345 = vmul.f32 %v331, 1.442695
      %v346 = vpow.pop %v345
      %v347 = vmul.f32 %v332, 1.442695
      %v348 = vpow.pop %v347
      %v349 = vadd.f32 %v334, 1.0
      %v350 = vadd.f32 %v336, 1.0
      %v351 = vadd.f32 %v338, 1.0
      %v352 = vadd.f32 %v340, 1.0
      %v353 = vadd.f32 %v342, 1.0
      %v354 = vadd.f32 %v344, 1.0
      %v355 = vadd.f32 %v346, 1.0
      %v356 = vadd.f32 %v348, 1.0
      %v357 = vrcp.pop %v349
      %v358 = vmul.f32 1.0, %v357
      %v359 = vrcp.pop %v350
      %v360 = vmul.f32 1.0, %v359
      %v361 = vrcp.pop %v351
      %v362 = vmul.f32 1.0, %v361
      %v363 = vrcp.pop %v352
      %v364 = vmul.f32 1.0, %v363
      %v365 = vrcp.pop %v353
      %v366 = vmul.f32 1.0, %v365
      %v367 = vrcp.pop %v354
      %v368 = vmul.f32 1.0, %v367
      %v369 = vrcp.pop %v355
      %v370 = vmul.f32 1.0, %v369
      %v371 = vrcp.pop %v356
      %v372 = vmul.f32 1.0, %v371
      %v373 = vld [vmem:[%s3] sm:$0xff]
      %vm374 = vcmask 523264
      %v376 = vsel %vm374, %v373, 0
      %v378 = vand.u32 %v199, 4294901760
      %379 = vmatprep.subr.mxu0 %v378
      %v380 = vand.u32 %v198, 4294901760
      %381 = vmatpush1.msra.mxu0 %v380
      %v382 = vand.u32 %v201, 4294901760
      %383 = vmatprep.subr.mxu0 %v382
      %v384 = vand.u32 %v200, 4294901760
      %385 = vmatpush1.msra.mxu0 %v384
      %v386 = vand.u32 %v203, 4294901760
      %387 = vmatprep.subr.mxu0 %v386
      %v388 = vand.u32 %v202, 4294901760
      %389 = vmatpush1.msra.mxu0 %v388
      %v390 = vand.u32 %v205, 4294901760
      %391 = vmatprep.subr.mxu0 %v390
      %v392 = vand.u32 %v204, 4294901760
      %393 = vmatpush1.msra.mxu0 %v392
      %v394 = vand.u32 %v207, 4294901760
      %395 = vmatprep.subr.mxu0 %v394
      %v396 = vand.u32 %v206, 4294901760
      %397 = vmatpush1.msra.mxu0 %v396
      %v398 = vand.u32 %v209, 4294901760
      %399 = vmatprep.subr.mxu0 %v398
      %v400 = vand.u32 %v208, 4294901760
      %401 = vmatpush1.msra.mxu0 %v400
      %v402 = vand.u32 %v211, 4294901760
      %403 = vmatprep.subr.mxu0 %v402
      %v404 = vand.u32 %v210, 4294901760
      %405 = vmatpush1.msra.mxu0 %v404
      %v406 = vand.u32 %v213, 4294901760
      %407 = vmatprep.subr.mxu0 %v406
      %v408 = vand.u32 %v212, 4294901760
      %409 = vmatpush1.msra.mxu0 %v408
      %410 = vmatprep.subr.mxu0 0.0
      %411 = vmatpush1.msra.mxu0 0.0
      %412 = vmatprep.subr.mxu0 0.0
      %413 = vmatpush1.msra.mxu0 0.0
      %414 = vmatprep.subr.mxu0 0.0
      %415 = vmatpush1.msra.mxu0 0.0
      %416 = vmatprep.subr.mxu0 0.0
      %417 = vmatpush1.msra.mxu0 0.0
      %418 = vmatprep.subr.mxu0 0.0
      %419 = vmatpush1.msra.mxu0 0.0
      %420 = vmatprep.subr.mxu0 0.0
      %421 = vmatpush1.msra.mxu0 0.0
      %422 = vmatprep.subr.mxu0 0.0
      %423 = vmatpush1.msra.mxu0 0.0
      %424 = vmatprep.subr.mxu0 0.0
      %425 = vmatpush1.msra.mxu0 0.0
      %426 = vmatprep.subr.mxu0 0.0
      %427 = vmatpush1.msra.mxu0 0.0
      %428 = vmatprep.subr.mxu0 0.0
      %429 = vmatpush1.msra.mxu0 0.0
      %430 = vmatprep.subr.mxu0 0.0
      %431 = vmatpush1.msra.mxu0 0.0
      %432 = vmatprep.subr.mxu0 0.0
      %433 = vmatpush1.msra.mxu0 0.0
      %434 = vmatprep.subr.mxu0 0.0
      %435 = vmatpush1.msra.mxu0 0.0
      %436 = vmatprep.subr.mxu0 0.0
      %437 = vmatpush1.msra.mxu0 0.0
      %438 = vmatprep.subr.mxu0 0.0
      %439 = vmatpush1.msra.mxu0 0.0
      %440 = vmatprep.subr.mxu0 0.0
      %441 = vmatpush1.msra.mxu0 0.0
      %442 = vmatprep.subr.mxu0 0.0
      %443 = vmatpush1.msra.mxu0 0.0
      %444 = vmatprep.subr.mxu0 0.0
      %445 = vmatpush1.msra.mxu0 0.0
      %446 = vmatprep.subr.mxu0 0.0
      %447 = vmatpush1.msra.mxu0 0.0
      %448 = vmatprep.subr.mxu0 0.0
      %449 = vmatpush1.msra.mxu0 0.0
      %450 = vmatprep.subr.mxu0 0.0
      %451 = vmatpush1.msra.mxu0 0.0
      %452 = vmatprep.subr.mxu0 0.0
      %453 = vmatpush1.msra.mxu0 0.0
      %454 = vmatprep.subr.mxu0 0.0
      %455 = vmatpush1.msra.mxu0 0.0
      %456 = vmatprep.subr.mxu0 0.0
      %457 = vmatpush1.msra.mxu0 0.0
      %458 = vmatprep.mubr.f32.mxu0 0.0
      %v459 = vand.u32 %v376, 4294901760
      %v460 = vsub.f32 %v376, %v459
      %v461 = vand.u32 %v460, 4294901760
      %v462 = vsub.f32 %v460, %v461
      %v463 = vand.u32 %v462, 4294901760
      %464 = vmatmul.mubr.f32.gmra.mrb[0].mxu0 %v463
      %v465 = vpop.f32.mrb[0].mxu0
      %v466 = vadd.f32 0.0, %v465
      %v467 = vpop.f32.mrb[0].mxu0
      %v468 = vadd.f32 0.0, %v467
      %469 = vdwg.mxu0
      %v470 = vand.u32 %v199, 4294901760
      %v471 = vsub.f32 %v199, %v470
      %v472 = vand.u32 %v471, 4294901760
      %v473 = vsub.f32 %v471, %v472
      %v474 = vand.u32 %v473, 4294901760
      %475 = vmatprep.subr.mxu0 %v474
      %v476 = vand.u32 %v198, 4294901760
      %v477 = vsub.f32 %v198, %v476
      %v478 = vand.u32 %v477, 4294901760
      %v479 = vsub.f32 %v477, %v478
      %v480 = vand.u32 %v479, 4294901760
      %481 = vmatpush1.msra.mxu0 %v480
      %v482 = vand.u32 %v201, 4294901760
      %v483 = vsub.f32 %v201, %v482
      %v484 = vand.u32 %v483, 4294901760
      %v485 = vsub.f32 %v483, %v484
      %v486 = vand.u32 %v485, 4294901760
      %487 = vmatprep.subr.mxu0 %v486
      %v488 = vand.u32 %v200, 4294901760
      %v489 = vsub.f32 %v200, %v488
      %v490 = vand.u32 %v489, 4294901760
      %v491 = vsub.f32 %v489, %v490
      %v492 = vand.u32 %v491, 4294901760
      %493 = vmatpush1.msra.mxu0 %v492
      %v494 = vand.u32 %v203, 4294901760
      %v495 = vsub.f32 %v203, %v494
      %v496 = vand.u32 %v495, 4294901760
      %v497 = vsub.f32 %v495, %v496
      %v498 = vand.u32 %v497, 4294901760
      %499 = vmatprep.subr.mxu0 %v498
      %v500 = vand.u32 %v202, 4294901760
      %v501 = vsub.f32 %v202, %v500
      %v502 = vand.u32 %v501, 4294901760
      %v503 = vsub.f32 %v501, %v502
      %v504 = vand.u32 %v503, 4294901760
      %505 = vmatpush1.msra.mxu0 %v504
      %v506 = vand.u32 %v205, 4294901760
      %v507 = vsub.f32 %v205, %v506
      %v508 = vand.u32 %v507, 4294901760
      %v509 = vsub.f32 %v507, %v508
      %v510 = vand.u32 %v509, 4294901760
      %511 = vmatprep.subr.mxu0 %v510
      %v512 = vand.u32 %v204, 4294901760
      %v513 = vsub.f32 %v204, %v512
      %v514 = vand.u32 %v513, 4294901760
      %v515 = vsub.f32 %v513, %v514
      %v516 = vand.u32 %v515, 4294901760
      %517 = vmatpush1.msra.mxu0 %v516
      %v518 = vand.u32 %v207, 4294901760
      %v519 = vsub.f32 %v207, %v518
      %v520 = vand.u32 %v519, 4294901760
      %v521 = vsub.f32 %v519, %v520
      %v522 = vand.u32 %v521, 4294901760
      %523 = vmatprep.subr.mxu0 %v522
      %v524 = vand.u32 %v206, 4294901760
      %v525 = vsub.f32 %v206, %v524
      %v526 = vand.u32 %v525, 4294901760
      %v527 = vsub.f32 %v525, %v526
      %v528 = vand.u32 %v527, 4294901760
      %529 = vmatpush1.msra.mxu0 %v528
      %v530 = vand.u32 %v209, 4294901760
      %v531 = vsub.f32 %v209, %v530
      %v532 = vand.u32 %v531, 4294901760
      %v533 = vsub.f32 %v531, %v532
      %v534 = vand.u32 %v533, 4294901760
      %535 = vmatprep.subr.mxu0 %v534
      %v536 = vand.u32 %v208, 4294901760
      %v537 = vsub.f32 %v208, %v536
      %v538 = vand.u32 %v537, 4294901760
      %v539 = vsub.f32 %v537, %v538
      %v540 = vand.u32 %v539, 4294901760
      %541 = vmatpush1.msra.mxu0 %v540
      %v542 = vand.u32 %v211, 4294901760
      %v543 = vsub.f32 %v211, %v542
      %v544 = vand.u32 %v543, 4294901760
      %v545 = vsub.f32 %v543, %v544
      %v546 = vand.u32 %v545, 4294901760
      %547 = vmatprep.subr.mxu0 %v546
      %v548 = vand.u32 %v210, 4294901760
      %v549 = vsub.f32 %v210, %v548
      %v550 = vand.u32 %v549, 4294901760
      %v551 = vsub.f32 %v549, %v550
      %v552 = vand.u32 %v551, 4294901760
      %553 = vmatpush1.msra.mxu0 %v552
      %v554 = vand.u32 %v213, 4294901760
      %v555 = vsub.f32 %v213, %v554
      %v556 = vand.u32 %v555, 4294901760
      %v557 = vsub.f32 %v555, %v556
      %v558 = vand.u32 %v557, 4294901760
      %559 = vmatprep.subr.mxu0 %v558
      %v560 = vand.u32 %v212, 4294901760
      %v561 = vsub.f32 %v212, %v560
      %v562 = vand.u32 %v561, 4294901760
      %v563 = vsub.f32 %v561, %v562
      %v564 = vand.u32 %v563, 4294901760
      %565 = vmatpush1.msra.mxu0 %v564
      %566 = vmatprep.subr.mxu0 0.0
      %567 = vmatpush1.msra.mxu0 0.0
      %568 = vmatprep.subr.mxu0 0.0
      %569 = vmatpush1.msra.mxu0 0.0
      %570 = vmatprep.subr.mxu0 0.0
      %571 = vmatpush1.msra.mxu0 0.0
      %572 = vmatprep.subr.mxu0 0.0
      %573 = vmatpush1.msra.mxu0 0.0
      %574 = vmatprep.subr.mxu0 0.0
      %575 = vmatpush1.msra.mxu0 0.0
      %576 = vmatprep.subr.mxu0 0.0
      %577 = vmatpush1.msra.mxu0 0.0
      %578 = vmatprep.subr.mxu0 0.0
      %579 = vmatpush1.msra.mxu0 0.0
      %580 = vmatprep.subr.mxu0 0.0
      %581 = vmatpush1.msra.mxu0 0.0
      %582 = vmatprep.subr.mxu0 0.0
      %583 = vmatpush1.msra.mxu0 0.0
      %584 = vmatprep.subr.mxu0 0.0
      %585 = vmatpush1.msra.mxu0 0.0
      %586 = vmatprep.subr.mxu0 0.0
      %587 = vmatpush1.msra.mxu0 0.0
      %588 = vmatprep.subr.mxu0 0.0
      %589 = vmatpush1.msra.mxu0 0.0
      %590 = vmatprep.subr.mxu0 0.0
      %591 = vmatpush1.msra.mxu0 0.0
      %592 = vmatprep.subr.mxu0 0.0
      %593 = vmatpush1.msra.mxu0 0.0
      %594 = vmatprep.subr.mxu0 0.0
      %595 = vmatpush1.msra.mxu0 0.0
      %596 = vmatprep.subr.mxu0 0.0
      %597 = vmatpush1.msra.mxu0 0.0
      %598 = vmatprep.subr.mxu0 0.0
      %599 = vmatpush1.msra.mxu0 0.0
      %600 = vmatprep.subr.mxu0 0.0
      %601 = vmatpush1.msra.mxu0 0.0
      %602 = vmatprep.subr.mxu0 0.0
      %603 = vmatpush1.msra.mxu0 0.0
      %604 = vmatprep.subr.mxu0 0.0
      %605 = vmatpush1.msra.mxu0 0.0
      %606 = vmatprep.subr.mxu0 0.0
      %607 = vmatpush1.msra.mxu0 0.0
      %608 = vmatprep.subr.mxu0 0.0
      %609 = vmatpush1.msra.mxu0 0.0
      %610 = vmatprep.subr.mxu0 0.0
      %611 = vmatpush1.msra.mxu0 0.0
      %612 = vmatprep.subr.mxu0 0.0
      %613 = vmatpush1.msra.mxu0 0.0
      %614 = vmatprep.mubr.f32.mxu0 0.0
      %v615 = vand.u32 %v376, 4294901760
      %616 = vmatmul.mubr.f32.gmra.mrb[0].mxu0 %v615
      %v617 = vpop.f32.mrb[0].mxu0
      %v618 = vadd.f32 %v466, %v617
      %v619 = vpop.f32.mrb[0].mxu0
      %v620 = vadd.f32 %v468, %v619
      %621 = vdwg.mxu0
      %v622 = vand.u32 %v199, 4294901760
      %v623 = vsub.f32 %v199, %v622
      %624 = vmatprep.subr.mxu0 %v623
      %v625 = vand.u32 %v198, 4294901760
      %v626 = vsub.f32 %v198, %v625
      %627 = vmatpush1.msra.mxu0 %v626
      %v628 = vand.u32 %v201, 4294901760
      %v629 = vsub.f32 %v201, %v628
      %630 = vmatprep.subr.mxu0 %v629
      %v631 = vand.u32 %v200, 4294901760
      %v632 = vsub.f32 %v200, %v631
      %633 = vmatpush1.msra.mxu0 %v632
      %v634 = vand.u32 %v203, 4294901760
      %v635 = vsub.f32 %v203, %v634
      %636 = vmatprep.subr.mxu0 %v635
      %v637 = vand.u32 %v202, 4294901760
      %v638 = vsub.f32 %v202, %v637
      %639 = vmatpush1.msra.mxu0 %v638
      %v640 = vand.u32 %v205, 4294901760
      %v641 = vsub.f32 %v205, %v640
      %642 = vmatprep.subr.mxu0 %v641
      %v643 = vand.u32 %v204, 4294901760
      %v644 = vsub.f32 %v204, %v643
      %645 = vmatpush1.msra.mxu0 %v644
      %v646 = vand.u32 %v207, 4294901760
      %v647 = vsub.f32 %v207, %v646
      %648 = vmatprep.subr.mxu0 %v647
      %v649 = vand.u32 %v206, 4294901760
      %v650 = vsub.f32 %v206, %v649
      %651 = vmatpush1.msra.mxu0 %v650
      %v652 = vand.u32 %v209, 4294901760
      %v653 = vsub.f32 %v209, %v652
      %654 = vmatprep.subr.mxu0 %v653
      %v655 = vand.u32 %v208, 4294901760
      %v656 = vsub.f32 %v208, %v655
      %657 = vmatpush1.msra.mxu0 %v656
      %v658 = vand.u32 %v211, 4294901760
      %v659 = vsub.f32 %v211, %v658
      %660 = vmatprep.subr.mxu0 %v659
      %v661 = vand.u32 %v210, 4294901760
      %v662 = vsub.f32 %v210, %v661
      %663 = vmatpush1.msra.mxu0 %v662
      %v664 = vand.u32 %v213, 4294901760
      %v665 = vsub.f32 %v213, %v664
      %666 = vmatprep.subr.mxu0 %v665
      %v667 = vand.u32 %v212, 4294901760
      %v668 = vsub.f32 %v212, %v667
      %669 = vmatpush1.msra.mxu0 %v668
      %670 = vmatprep.subr.mxu0 0.0
      %671 = vmatpush1.msra.mxu0 0.0
      %672 = vmatprep.subr.mxu0 0.0
      %673 = vmatpush1.msra.mxu0 0.0
      %674 = vmatprep.subr.mxu0 0.0
      %675 = vmatpush1.msra.mxu0 0.0
      %676 = vmatprep.subr.mxu0 0.0
      %677 = vmatpush1.msra.mxu0 0.0
      %678 = vmatprep.subr.mxu0 0.0
      %679 = vmatpush1.msra.mxu0 0.0
      %680 = vmatprep.subr.mxu0 0.0
      %681 = vmatpush1.msra.mxu0 0.0
      %682 = vmatprep.subr.mxu0 0.0
      %683 = vmatpush1.msra.mxu0 0.0
      %684 = vmatprep.subr.mxu0 0.0
      %685 = vmatpush1.msra.mxu0 0.0
      %686 = vmatprep.subr.mxu0 0.0
      %687 = vmatpush1.msra.mxu0 0.0
      %688 = vmatprep.subr.mxu0 0.0
      %689 = vmatpush1.msra.mxu0 0.0
      %690 = vmatprep.subr.mxu0 0.0
      %691 = vmatpush1.msra.mxu0 0.0
      %692 = vmatprep.subr.mxu0 0.0
      %693 = vmatpush1.msra.mxu0 0.0
      %694 = vmatprep.subr.mxu0 0.0
      %695 = vmatpush1.msra.mxu0 0.0
      %696 = vmatprep.subr.mxu0 0.0
      %697 = vmatpush1.msra.mxu0 0.0
      %698 = vmatprep.subr.mxu0 0.0
      %699 = vmatpush1.msra.mxu0 0.0
      %700 = vmatprep.subr.mxu0 0.0
      %701 = vmatpush1.msra.mxu0 0.0
      %702 = vmatprep.subr.mxu0 0.0
      %703 = vmatpush1.msra.mxu0 0.0
      %704 = vmatprep.subr.mxu0 0.0
      %705 = vmatpush1.msra.mxu0 0.0
      %706 = vmatprep.subr.mxu0 0.0
      %707 = vmatpush1.msra.mxu0 0.0
      %708 = vmatprep.subr.mxu0 0.0
      %709 = vmatpush1.msra.mxu0 0.0
      %710 = vmatprep.subr.mxu0 0.0
      %711 = vmatpush1.msra.mxu0 0.0
      %712 = vmatprep.subr.mxu0 0.0
      %713 = vmatpush1.msra.mxu0 0.0
      %714 = vmatprep.subr.mxu0 0.0
      %715 = vmatpush1.msra.mxu0 0.0
      %716 = vmatprep.subr.mxu0 0.0
      %717 = vmatpush1.msra.mxu0 0.0
      %718 = vmatprep.mubr.f32.mxu0 0.0
      %v719 = vand.u32 %v376, 4294901760
      %v720 = vsub.f32 %v376, %v719
      %721 = vmatmul.mubr.f32.gmra.mrb[0].mxu0 %v720
      %v722 = vpop.f32.mrb[0].mxu0
      %v723 = vadd.f32 %v618, %v722
      %v724 = vpop.f32.mrb[0].mxu0
      %v725 = vadd.f32 %v620, %v724
      %726 = vdwg.mxu0
      %v727 = vand.u32 %v199, 4294901760
      %728 = vmatprep.subr.mxu0 %v727
      %v729 = vand.u32 %v198, 4294901760
      %730 = vmatpush1.msra.mxu0 %v729
      %v731 = vand.u32 %v201, 4294901760
      %732 = vmatprep.subr.mxu0 %v731
      %v733 = vand.u32 %v200, 4294901760
      %734 = vmatpush1.msra.mxu0 %v733
      %v735 = vand.u32 %v203, 4294901760
      %736 = vmatprep.subr.mxu0 %v735
      %v737 = vand.u32 %v202, 4294901760
      %738 = vmatpush1.msra.mxu0 %v737
      %v739 = vand.u32 %v205, 4294901760
      %740 = vmatprep.subr.mxu0 %v739
      %v741 = vand.u32 %v204, 4294901760
      %742 = vmatpush1.msra.mxu0 %v741
      %v743 = vand.u32 %v207, 4294901760
      %744 = vmatprep.subr.mxu0 %v743
      %v745 = vand.u32 %v206, 4294901760
      %746 = vmatpush1.msra.mxu0 %v745
      %v747 = vand.u32 %v209, 4294901760
      %748 = vmatprep.subr.mxu0 %v747
      %v749 = vand.u32 %v208, 4294901760
      %750 = vmatpush1.msra.mxu0 %v749
      %v751 = vand.u32 %v211, 4294901760
      %752 = vmatprep.subr.mxu0 %v751
      %v753 = vand.u32 %v210, 4294901760
      %754 = vmatpush1.msra.mxu0 %v753
      %v755 = vand.u32 %v213, 4294901760
      %756 = vmatprep.subr.mxu0 %v755
      %v757 = vand.u32 %v212, 4294901760
      %758 = vmatpush1.msra.mxu0 %v757
      %759 = vmatprep.subr.mxu0 0.0
      %760 = vmatpush1.msra.mxu0 0.0
      %761 = vmatprep.subr.mxu0 0.0
      %762 = vmatpush1.msra.mxu0 0.0
      %763 = vmatprep.subr.mxu0 0.0
      %764 = vmatpush1.msra.mxu0 0.0
      %765 = vmatprep.subr.mxu0 0.0
      %766 = vmatpush1.msra.mxu0 0.0
      %767 = vmatprep.subr.mxu0 0.0
      %768 = vmatpush1.msra.mxu0 0.0
      %769 = vmatprep.subr.mxu0 0.0
      %770 = vmatpush1.msra.mxu0 0.0
      %771 = vmatprep.subr.mxu0 0.0
      %772 = vmatpush1.msra.mxu0 0.0
      %773 = vmatprep.subr.mxu0 0.0
      %774 = vmatpush1.msra.mxu0 0.0
      %775 = vmatprep.subr.mxu0 0.0
      %776 = vmatpush1.msra.mxu0 0.0
      %777 = vmatprep.subr.mxu0 0.0
      %778 = vmatpush1.msra.mxu0 0.0
      %779 = vmatprep.subr.mxu0 0.0
      %780 = vmatpush1.msra.mxu0 0.0
      %781 = vmatprep.subr.mxu0 0.0
      %782 = vmatpush1.msra.mxu0 0.0
      %783 = vmatprep.subr.mxu0 0.0
      %784 = vmatpush1.msra.mxu0 0.0
      %785 = vmatprep.subr.mxu0 0.0
      %786 = vmatpush1.msra.mxu0 0.0
      %787 = vmatprep.subr.mxu0 0.0
      %788 = vmatpush1.msra.mxu0 0.0
      %789 = vmatprep.subr.mxu0 0.0
      %790 = vmatpush1.msra.mxu0 0.0
      %791 = vmatprep.subr.mxu0 0.0
      %792 = vmatpush1.msra.mxu0 0.0
      %793 = vmatprep.subr.mxu0 0.0
      %794 = vmatpush1.msra.mxu0 0.0
      %795 = vmatprep.subr.mxu0 0.0
      %796 = vmatpush1.msra.mxu0 0.0
      %797 = vmatprep.subr.mxu0 0.0
      %798 = vmatpush1.msra.mxu0 0.0
      %799 = vmatprep.subr.mxu0 0.0
      %800 = vmatpush1.msra.mxu0 0.0
      %801 = vmatprep.subr.mxu0 0.0
      %802 = vmatpush1.msra.mxu0 0.0
      %803 = vmatprep.subr.mxu0 0.0
      %804 = vmatpush1.msra.mxu0 0.0
      %805 = vmatprep.subr.mxu0 0.0
      %806 = vmatpush1.msra.mxu0 0.0
      %807 = vmatprep.mubr.f32.mxu0 0.0
      %v808 = vand.u32 %v376, 4294901760
      %v809 = vsub.f32 %v376, %v808
      %v810 = vand.u32 %v809, 4294901760
      %811 = vmatmul.mubr.f32.gmra.mrb[0].mxu0 %v810
      %v812 = vpop.f32.mrb[0].mxu0
      %v813 = vadd.f32 %v723, %v812
      %v814 = vpop.f32.mrb[0].mxu0
      %v815 = vadd.f32 %v725, %v814
      %816 = vdwg.mxu0
      %v817 = vand.u32 %v199, 4294901760
      %v818 = vsub.f32 %v199, %v817
      %v819 = vand.u32 %v818, 4294901760
      %820 = vmatprep.subr.mxu0 %v819
      %v821 = vand.u32 %v198, 4294901760
      %v822 = vsub.f32 %v198, %v821
      %v823 = vand.u32 %v822, 4294901760
      %824 = vmatpush1.msra.mxu0 %v823
      %v825 = vand.u32 %v201, 4294901760
      %v826 = vsub.f32 %v201, %v825
      %v827 = vand.u32 %v826, 4294901760
      %828 = vmatprep.subr.mxu0 %v827
      %v829 = vand.u32 %v200, 4294901760
      %v830 = vsub.f32 %v200, %v829
      %v831 = vand.u32 %v830, 4294901760
      %832 = vmatpush1.msra.mxu0 %v831
      %v833 = vand.u32 %v203, 4294901760
      %v834 = vsub.f32 %v203, %v833
      %v835 = vand.u32 %v834, 4294901760
      %836 = vmatprep.subr.mxu0 %v835
      %v837 = vand.u32 %v202, 4294901760
      %v838 = vsub.f32 %v202, %v837
      %v839 = vand.u32 %v838, 4294901760
      %840 = vmatpush1.msra.mxu0 %v839
      %v841 = vand.u32 %v205, 4294901760
      %v842 = vsub.f32 %v205, %v841
      %v843 = vand.u32 %v842, 4294901760
      %844 = vmatprep.subr.mxu0 %v843
      %v845 = vand.u32 %v204, 4294901760
      %v846 = vsub.f32 %v204, %v845
      %v847 = vand.u32 %v846, 4294901760
      %848 = vmatpush1.msra.mxu0 %v847
      %v849 = vand.u32 %v207, 4294901760
      %v850 = vsub.f32 %v207, %v849
      %v851 = vand.u32 %v850, 4294901760
      %852 = vmatprep.subr.mxu0 %v851
      %v853 = vand.u32 %v206, 4294901760
      %v854 = vsub.f32 %v206, %v853
      %v855 = vand.u32 %v854, 4294901760
      %856 = vmatpush1.msra.mxu0 %v855
      %v857 = vand.u32 %v209, 4294901760
      %v858 = vsub.f32 %v209, %v857
      %v859 = vand.u32 %v858, 4294901760
      %860 = vmatprep.subr.mxu0 %v859
      %v861 = vand.u32 %v208, 4294901760
      %v862 = vsub.f32 %v208, %v861
      %v863 = vand.u32 %v862, 4294901760
      %864 = vmatpush1.msra.mxu0 %v863
      %v865 = vand.u32 %v211, 4294901760
      %v866 = vsub.f32 %v211, %v865
      %v867 = vand.u32 %v866, 4294901760
      %868 = vmatprep.subr.mxu0 %v867
      %v869 = vand.u32 %v210, 4294901760
      %v870 = vsub.f32 %v210, %v869
      %v871 = vand.u32 %v870, 4294901760
      %872 = vmatpush1.msra.mxu0 %v871
      %v873 = vand.u32 %v213, 4294901760
      %v874 = vsub.f32 %v213, %v873
      %v875 = vand.u32 %v874, 4294901760
      %876 = vmatprep.subr.mxu0 %v875
      %v877 = vand.u32 %v212, 4294901760
      %v878 = vsub.f32 %v212, %v877
      %v879 = vand.u32 %v878, 4294901760
      %880 = vmatpush1.msra.mxu0 %v879
      %881 = vmatprep.subr.mxu0 0.0
      %882 = vmatpush1.msra.mxu0 0.0
      %883 = vmatprep.subr.mxu0 0.0
      %884 = vmatpush1.msra.mxu0 0.0
      %885 = vmatprep.subr.mxu0 0.0
      %886 = vmatpush1.msra.mxu0 0.0
      %887 = vmatprep.subr.mxu0 0.0
      %888 = vmatpush1.msra.mxu0 0.0
      %889 = vmatprep.subr.mxu0 0.0
      %890 = vmatpush1.msra.mxu0 0.0
      %891 = vmatprep.subr.mxu0 0.0
      %892 = vmatpush1.msra.mxu0 0.0
      %893 = vmatprep.subr.mxu0 0.0
      %894 = vmatpush1.msra.mxu0 0.0
      %895 = vmatprep.subr.mxu0 0.0
      %896 = vmatpush1.msra.mxu0 0.0
      %897 = vmatprep.subr.mxu0 0.0
      %898 = vmatpush1.msra.mxu0 0.0
      %899 = vmatprep.subr.mxu0 0.0
      %900 = vmatpush1.msra.mxu0 0.0
      %901 = vmatprep.subr.mxu0 0.0
      %902 = vmatpush1.msra.mxu0 0.0
      %903 = vmatprep.subr.mxu0 0.0
      %904 = vmatpush1.msra.mxu0 0.0
      %905 = vmatprep.subr.mxu0 0.0
      %906 = vmatpush1.msra.mxu0 0.0
      %907 = vmatprep.subr.mxu0 0.0
      %908 = vmatpush1.msra.mxu0 0.0
      %909 = vmatprep.subr.mxu0 0.0
      %910 = vmatpush1.msra.mxu0 0.0
      %911 = vmatprep.subr.mxu0 0.0
      %912 = vmatpush1.msra.mxu0 0.0
      %913 = vmatprep.subr.mxu0 0.0
      %914 = vmatpush1.msra.mxu0 0.0
      %915 = vmatprep.subr.mxu0 0.0
      %916 = vmatpush1.msra.mxu0 0.0
      %917 = vmatprep.subr.mxu0 0.0
      %918 = vmatpush1.msra.mxu0 0.0
      %919 = vmatprep.subr.mxu0 0.0
      %920 = vmatpush1.msra.mxu0 0.0
      %921 = vmatprep.subr.mxu0 0.0
      %922 = vmatpush1.msra.mxu0 0.0
      %923 = vmatprep.subr.mxu0 0.0
      %924 = vmatpush1.msra.mxu0 0.0
      %925 = vmatprep.subr.mxu0 0.0
      %926 = vmatpush1.msra.mxu0 0.0
      %927 = vmatprep.subr.mxu0 0.0
      %928 = vmatpush1.msra.mxu0 0.0
      %929 = vmatprep.mubr.f32.mxu0 0.0
      %v930 = vand.u32 %v376, 4294901760
      %931 = vmatmul.mubr.f32.gmra.mrb[0].mxu0 %v930
      %v932 = vpop.f32.mrb[0].mxu0
      %v933 = vadd.f32 %v813, %v932
      %v934 = vpop.f32.mrb[0].mxu0
      %v935 = vadd.f32 %v815, %v934
      %936 = vdwg.mxu0
      %v937 = vand.u32 %v199, 4294901760
      %938 = vmatprep.subr.mxu0 %v937
      %v939 = vand.u32 %v198, 4294901760
      %940 = vmatpush1.msra.mxu0 %v939
      %v941 = vand.u32 %v201, 4294901760
      %942 = vmatprep.subr.mxu0 %v941
      %v943 = vand.u32 %v200, 4294901760
      %944 = vmatpush1.msra.mxu0 %v943
      %v945 = vand.u32 %v203, 4294901760
      %946 = vmatprep.subr.mxu0 %v945
      %v947 = vand.u32 %v202, 4294901760
      %948 = vmatpush1.msra.mxu0 %v947
      %v949 = vand.u32 %v205, 4294901760
      %950 = vmatprep.subr.mxu0 %v949
      %v951 = vand.u32 %v204, 4294901760
      %952 = vmatpush1.msra.mxu0 %v951
      %v953 = vand.u32 %v207, 4294901760
      %954 = vmatprep.subr.mxu0 %v953
      %v955 = vand.u32 %v206, 4294901760
      %956 = vmatpush1.msra.mxu0 %v955
      %v957 = vand.u32 %v209, 4294901760
      %958 = vmatprep.subr.mxu0 %v957
      %v959 = vand.u32 %v208, 4294901760
      %960 = vmatpush1.msra.mxu0 %v959
      %v961 = vand.u32 %v211, 4294901760
      %962 = vmatprep.subr.mxu0 %v961
      %v963 = vand.u32 %v210, 4294901760
      %964 = vmatpush1.msra.mxu0 %v963
      %v965 = vand.u32 %v213, 4294901760
      %966 = vmatprep.subr.mxu0 %v965
      %v967 = vand.u32 %v212, 4294901760
      %968 = vmatpush1.msra.mxu0 %v967
      %969 = vmatprep.subr.mxu0 0.0
      %970 = vmatpush1.msra.mxu0 0.0
      %971 = vmatprep.subr.mxu0 0.0
      %972 = vmatpush1.msra.mxu0 0.0
      %973 = vmatprep.subr.mxu0 0.0
      %974 = vmatpush1.msra.mxu0 0.0
      %975 = vmatprep.subr.mxu0 0.0
      %976 = vmatpush1.msra.mxu0 0.0
      %977 = vmatprep.subr.mxu0 0.0
      %978 = vmatpush1.msra.mxu0 0.0
      %979 = vmatprep.subr.mxu0 0.0
      %980 = vmatpush1.msra.mxu0 0.0
      %981 = vmatprep.subr.mxu0 0.0
      %982 = vmatpush1.msra.mxu0 0.0
      %983 = vmatprep.subr.mxu0 0.0
      %984 = vmatpush1.msra.mxu0 0.0
      %985 = vmatprep.subr.mxu0 0.0
      %986 = vmatpush1.msra.mxu0 0.0
      %987 = vmatprep.subr.mxu0 0.0
      %988 = vmatpush1.msra.mxu0 0.0
      %989 = vmatprep.subr.mxu0 0.0
      %990 = vmatpush1.msra.mxu0 0.0
      %991 = vmatprep.subr.mxu0 0.0
      %992 = vmatpush1.msra.mxu0 0.0
      %993 = vmatprep.subr.mxu0 0.0
      %994 = vmatpush1.msra.mxu0 0.0
      %995 = vmatprep.subr.mxu0 0.0
      %996 = vmatpush1.msra.mxu0 0.0
      %997 = vmatprep.subr.mxu0 0.0
      %998 = vmatpush1.msra.mxu0 0.0
      %999 = vmatprep.subr.mxu0 0.0
      %1000 = vmatpush1.msra.mxu0 0.0
      %1001 = vmatprep.subr.mxu0 0.0
      %1002 = vmatpush1.msra.mxu0 0.0
      %1003 = vmatprep.subr.mxu0 0.0
      %1004 = vmatpush1.msra.mxu0 0.0
      %1005 = vmatprep.subr.mxu0 0.0
      %1006 = vmatpush1.msra.mxu0 0.0
      %1007 = vmatprep.subr.mxu0 0.0
      %1008 = vmatpush1.msra.mxu0 0.0
      %1009 = vmatprep.subr.mxu0 0.0
      %1010 = vmatpush1.msra.mxu0 0.0
      %1011 = vmatprep.subr.mxu0 0.0
      %1012 = vmatpush1.msra.mxu0 0.0
      %1013 = vmatprep.subr.mxu0 0.0
      %1014 = vmatpush1.msra.mxu0 0.0
      %1015 = vmatprep.subr.mxu0 0.0
      %1016 = vmatpush1.msra.mxu0 0.0
      %1017 = vmatprep.mubr.f32.mxu0 0.0
      %v1018 = vand.u32 %v376, 4294901760
      %1019 = vmatmul.mubr.f32.gmra.mrb[0].mxu0 %v1018
      %v1020 = vpop.f32.mrb[0].mxu0
      %v1021 = vadd.f32 %v933, %v1020
      %v1022 = vpop.f32.mrb[0].mxu0
      %v1023 = vadd.f32 %v935, %v1022
      %1024 = vdwg.mxu0
      %v1025 = vxor.u32 %v1021, 2147483648
      %v1026 = vxor.u32 %v1023, 2147483648
      %v1027 = vmul.f32 %v1025, 1.442695
      %v1028 = vpow.pop %v1027
      %v1029 = vmul.f32 %v1026, 1.442695
      %v1030 = vpow.pop %v1029
      %v1031 = vadd.f32 %v1028, 1.0
      %v1032 = vadd.f32 %v1030, 1.0
      %v1033 = vrcp.pop %v1031
      %v1034 = vmul.f32 1.0, %v1033
      %v1035 = vrcp.pop %v1032
      %v1036 = vmul.f32 1.0, %v1035
      %v1037 = vlaneseq
      %v1038 = vshrl.u32 %v1037, 7
      %v1039 = vsub.s32 0, %v1038
      %v1040 = vrot.slane %v1034, %v1039
      %v1041 = vlaneseq
      %v1042 = vshrl.u32 %v1041, 7
      %v1043 = vsub.s32 0, %v1042
      %v1044 = vrot.slane %v1036, %v1043
      %v1045 = vadd.f32 %v358, %v1040
      %v1046 = vadd.f32 %v358, %v1044
      %v1047 = vadd.f32 %v360, %v1040
      %v1048 = vadd.f32 %v360, %v1044
      %v1049 = vadd.f32 %v362, %v1040
      %v1050 = vadd.f32 %v362, %v1044
      %v1051 = vadd.f32 %v364, %v1040
      %v1052 = vadd.f32 %v364, %v1044
      %v1053 = vadd.f32 %v366, %v1040
      %v1054 = vadd.f32 %v366, %v1044
      %v1055 = vadd.f32 %v368, %v1040
      %v1056 = vadd.f32 %v368, %v1044
      %v1057 = vadd.f32 %v370, %v1040
      %v1058 = vadd.f32 %v370, %v1044
      %v1059 = vadd.f32 %v372, %v1040
      %v1060 = vadd.f32 %v372, %v1044
      %v1061 = vmul.f32 %v198, %v1045
      %v1062 = vmul.f32 %v199, %v1046
      %v1063 = vmul.f32 %v200, %v1047
      %v1064 = vmul.f32 %v201, %v1048
      %v1065 = vmul.f32 %v202, %v1049
      %v1066 = vmul.f32 %v203, %v1050
      %v1067 = vmul.f32 %v204, %v1051
      %v1068 = vmul.f32 %v205, %v1052
      %v1069 = vmul.f32 %v206, %v1053
      %v1070 = vmul.f32 %v207, %v1054
      %v1071 = vmul.f32 %v208, %v1055
      %v1072 = vmul.f32 %v209, %v1056
      %v1073 = vmul.f32 %v210, %v1057
      %v1074 = vmul.f32 %v211, %v1058
      %v1075 = vmul.f32 %v212, %v1059
      %v1076 = vmul.f32 %v213, %v1060
      %1077 = vst [vmem:[%s197] sm:$0xff] %v1061
      %1078 = vst [vmem:[%s197 + $0x8] sm:$0xff] %v1062
      %1079 = vst [vmem:[%s197 + $0x10] sm:$0xff] %v1063
      %1080 = vst [vmem:[%s197 + $0x18] sm:$0xff] %v1064
      %1081 = vst [vmem:[%s197 + $0x20] sm:$0xff] %v1065
      %1082 = vst [vmem:[%s197 + $0x28] sm:$0xff] %v1066
      %1083 = vst [vmem:[%s197 + $0x30] sm:$0xff] %v1067
      %1084 = vst [vmem:[%s197 + $0x38] sm:$0xff] %v1068
      %1085 = vst [vmem:[%s197 + $0x40] sm:$0xff] %v1069
      %1086 = vst [vmem:[%s197 + $0x48] sm:$0xff] %v1070
      %1087 = vst [vmem:[%s197 + $0x50] sm:$0xff] %v1071
      %1088 = vst [vmem:[%s197 + $0x58] sm:$0xff] %v1072
      %1089 = vst [vmem:[%s197 + $0x60] sm:$0xff] %v1073
      %1090 = vst [vmem:[%s197 + $0x68] sm:$0xff] %v1074
      %1091 = vst [vmem:[%s197 + $0x70] sm:$0xff] %v1075
      %1092 = vst [vmem:[%s197 + $0x78] sm:$0xff] %v1076
      %p1093 = scmp.lt.s32.totalorder %s15, 1
      %s1094 = scalar_select %p1093, %s15, 1
      %s1095 = smul.addr %s1094, 16
      %s1096 = smul.addr %s1095, 8
      %s1097 = scalar_lea.vmem %s4, %s1096
      // Predicated region
      $region37: #{scse_forward.1} parent=35 // pred_check
        %p1098 = pneg %p122
      $region38: #{scse_forward.1} parent=35 // pred_check_branch
        %1100 = sbr.rel (%p1098) target = $region40
      $region39: #{scse_forward.1} parent=35 // pred_region
        _
      $region40: #{scse_forward.1} parent=35 // pred_fallthru
        _
    $region36: #{scse_forward.1} parent=5 // pred_fallthru
      _
    %p1101 = scmp.le.s32.totalorder 2, %s10
    // Predicated region
    $region41: #{scse_forward.1} parent=5 // pred_check
      %p1102 = pneg %p1101
    $region42: #{scse_forward.1} parent=5 // pred_check_branch
      %1104 = sbr.rel (%p1102) target = $region44
    $region43: #{scse_forward.1} parent=5 // pred_region
      %s1105 = ssub.s32 %s10, 2
      // Predicated region
      $region45: #{scse_forward.1} parent=43 // pred_check
        %p1106 = pneg %p128
      $region46: #{scse_forward.1} parent=43 // pred_check_branch
        %1108 = sbr.rel (%p1106) target = $region48
      $region47: #{scse_forward.1} parent=43 // pred_region
        %p1109 = scmp.lt.s32.totalorder %s16, 1
        %s1110 = scalar_select %p1109, %s16, 1
        %s1111 = smul.addr %s1110, 16
        %s1112 = smul.addr %s1111, 8
        %s1113 = scalar_lea.vmem %s4, %s1112
      $region48: #{scse_forward.1} parent=43 // pred_fallthru
        _
    $region44: #{scse_forward.1} parent=5 // pred_fallthru
      _
  $region6: #{scse_forward.1} parent=0 // loop_footer
    %s14 = sadd.s32 1, %s10
  $region7: #{scse_forward.1} parent=0 // loop_footer_branch
    %9 = sbr.rel target = $region3
  $region8: #{scse_forward.1} parent=0 // loop_exit
    _

</llo_original>
